<compile_context>
chip_gen: v5e
topology: v5e:2x2
jax: 0.10.0
libtpu: 0.0.40
codegen_flags: <defaults>
</compile_context>

<pallas_src>
import functools
import math

import jax
import jax.numpy as jnp
from jax.experimental import pallas as pl
from jax.experimental.pallas import tpu as pltpu


def _round_up(x, m):
    return ((x + m - 1) // m) * m


def _gelu_exact(x):
    # torch.nn.GELU() default (erf-based, not tanh approximation)
    return 0.5 * x * (1.0 + jax.lax.erf(x * (1.0 / math.sqrt(2.0))))


def _vmem_capacity_bytes():
    try:
        return int(pltpu.get_tpu_info().vmem_capacity_bytes)
    except Exception:
        return 64 * 1024 * 1024  # conservative fallback (v7x-sized)


def _vmem_bytes(tr, tn, e, n_hidden, wout_bufs, hidden_bufs, out_itemsize):
    """Rough per-core VMEM residency for the chosen tiling."""
    x_tile = 2 * tr * e * 2                                    # bf16 input row tile, dbl-buf
    hidden = n_hidden * hidden_bufs * (e * e * 2 + 3 * e * 4)  # w (bf16) + b/g/beta (f32)
    wout = wout_bufs * e * tn * 2                              # streamed bf16 vocab tile
    bout = wout_bufs * tn * 4
    out_tile = 2 * tr * tn * out_itemsize                      # output tile, dbl-buf
    scratch = tr * e * 2                                       # bf16 hidden-activation cache
    return x_tile + hidden + wout + bout + out_tile + scratch


def _unembedder_kernel(num_hidden_layers, *refs):
    """refs = [x, (w,b,gamma,beta) * (H-1), w_out, b_out, o, h_scratch]."""
    x_ref = refs[0]
    o_ref = refs[-2]
    h_ref = refs[-1]                      # VMEM scratch: hidden activation (tr, E) bf16
    p = refs[1:-2]
    w_out_ref, b_out_ref = p[-2], p[-1]

    j = pl.program_id(1)

    # Hidden stack only once per row tile (at the first out-tile), cached in bf16 scratch.
    @pl.when(j == 0)
    def _compute_hidden():
        x = x_ref[...]                     # already bf16
        for li in range(num_hidden_layers - 1):
            w_ref, b_ref, g_ref, beta_ref = p[4 * li: 4 * li + 4]
            # Linear: bf16 MXU inputs, f32 accumulation.
            y = jnp.dot(x.astype(jnp.bfloat16), w_ref[...],
                        preferred_element_type=jnp.float32)
            y = y + b_ref[...].astype(jnp.float32)
            # LayerNorm (torch eps=1e-5), single pass: var = E[x^2] - mean^2 (clamped >= 0).
            inv_e = 1.0 / y.shape[-1]
            mean = jnp.sum(y, axis=-1, keepdims=True) * inv_e
            mean_sq = jnp.sum(y * y, axis=-1, keepdims=True) * inv_e
            var = jnp.maximum(mean_sq - mean * mean, 0.0)
            y = (y - mean) * jax.lax.rsqrt(var + 1e-5)
            y = y * g_ref[...].astype(jnp.float32) + beta_ref[...].astype(jnp.float32)
            # GELU (exact, erf-based to match torch.nn.GELU()).
            x = _gelu_exact(y)
            # Dropout: identity in eval mode.
            # TODO(synk): training-mode dropout would need pltpu.prng_* masking.
        h_ref[...] = x.astype(jnp.bfloat16)

    # Final Linear over the current out-dim tile, reusing the cached bf16 hidden activation.
    out = jnp.dot(h_ref[...], w_out_ref[...], preferred_element_type=jnp.float32)
    out = out + b_out_ref[...].astype(jnp.float32)
    o_ref[...] = out.astype(o_ref.dtype)


def unembedder_forward(inputs, params, num_hidden_layers, *, row_tile=None, out_tile=None):
    """inputs: (B, S, E) float32.  Returns {'outputs': (B, S, out_dim)}."""
    b, s, e = inputs.shape
    n = b * s
    out_dim = params["w_out"].shape[1]
    out_dtype = inputs.dtype
    out_itemsize = jnp.dtype(out_dtype).itemsize
    n_hidden = num_hidden_layers - 1

    # ---- per-generation VMEM budget -------------------------------------------------
    vmem_cap = _vmem_capacity_bytes()
    # Leave headroom for compiler-internal scratch: v7x (64 MiB) -> ~52 MiB,
    # v5e/v6e (128 MiB) -> ~112 MiB.
    vmem_limit = max(32 << 20, min(vmem_cap - (12 << 20), 112 << 20))

    if row_tile is None or out_tile is None:
        if vmem_limit >= (96 << 20):      # v5e / v6e: plenty of VMEM, wide tiles
            d_row, d_out = 512, 1024
        else:                              # v7x: 64 MiB physical
            d_row, d_out = 512, 512
        row_tile = row_tile or d_row
        out_tile = out_tile or d_out

    # Row tiling: full extent for tiny problems, else `row_tile`; rows rounded to 16
    # (bf16 sublane packing).  Out-dim tiles are 128-lane multiples (dense vst).
    tr = min(row_tile, _round_up(n, 16))
    tn = min(out_tile, _round_up(out_dim, 128))

    wout_bufs = 3 if vmem_limit >= (96 << 20) else 2   # extra w_out buffer only off-v7x
    hidden_bufs = 1                                     # grid-invariant params: Buffered(1)

    hidden_w_bytes = n_hidden * (e * e * 2 + 3 * e * 4)
    # TODO(synk): if hidden_w_bytes exceeds ~half of vmem_limit (very large embed_dim),
    # K-tile the hidden matmuls (stream w{li} over E-chunks) instead of full residency.

    budget_cap = int(0.9 * vmem_limit)

    def _fits(tr_, tn_, wb_):
        return _vmem_bytes(tr_, tn_, e, n_hidden, wb_, hidden_bufs, out_itemsize) <= budget_cap

    if not _fits(tr, tn, wout_bufs):
        wout_bufs = 2
    while not _fits(tr, tn, wout_bufs) and tn > 128:
        tn = max(128, ((tn // 2) // 128) * 128)
    while not _fits(tr, tn, wout_bufs) and tr > 16:
        tr = max(16, ((tr // 2) // 16) * 16)

    n_pad = _round_up(n, tr)
    out_pad = _round_up(out_dim, tn)
    grid = (n_pad // tr, out_pad // tn)

    # ---- host-side param / input prep ----------------------------------------------
    # bf16 activations + weights halve HBM traffic and VMEM residency; the MXU already
    # runs at the bf16 rate with f32 accumulation, so this is numerically equivalent to
    # the previous in-kernel cast.  Biases / LN params stay f32.
    x = inputs.reshape(n, e).astype(jnp.bfloat16)
    x_p = x if n_pad == n else jnp.pad(x, ((0, n_pad - n), (0, 0)))

    w_out = params["w_out"].astype(jnp.bfloat16)
    b_out = params["b_out"].astype(jnp.float32)
    if out_pad != out_dim:
        w_out = jnp.pad(w_out, ((0, 0), (0, out_pad - out_dim)))
        b_out = jnp.pad(b_out, ((0, 0), (0, out_pad - out_dim)))

    flat_params = []
    hidden_param_bytes = 0
    for li in range(n_hidden):
        w = params[f"w{li}"].astype(jnp.bfloat16)
        bb = params[f"b{li}"].astype(jnp.float32)
        g = params[f"g{li}"].astype(jnp.float32)
        beta = params[f"beta{li}"].astype(jnp.float32)
        flat_params += [w, bb, g, beta]
        hidden_param_bytes += w.size * 2 + (bb.size + g.size + beta.size) * 4
    flat_params += [w_out, b_out]

    # ---- specs ----------------------------------------------------------------------
    def _build_in_specs(use_buffered):
        resident = {"pipeline_mode": pl.Buffered(1)} if use_buffered else {}
        stream = ({"pipeline_mode": pl.Buffered(wout_bufs)}
                  if (use_buffered and wout_bufs != 2) else {})
        specs = [pl.BlockSpec((tr, e), lambda i, j: (i, 0))]          # x row tile (bf16)
        for _ in range(n_hidden):
            specs += [
                pl.BlockSpec((e, e), lambda i, j: (0, 0), **resident),  # grid-invariant
                pl.BlockSpec((1, e), lambda i, j: (0, 0), **resident),
                pl.BlockSpec((1, e), lambda i, j: (0, 0), **resident),
                pl.BlockSpec((1, e), lambda i, j: (0, 0), **resident),
            ]
        specs += [
            pl.BlockSpec((e, tn), lambda i, j: (0, j), **stream),       # streamed vocab tile
            pl.BlockSpec((1, tn), lambda i, j: (0, j), **stream),
        ]
        return specs

    # ---- cost estimate ---------------------------------------------------------------
    n_row_tiles = n_pad // tr
    flops = 2 * n_pad * e * e * n_hidden + 2 * n_pad * e * out_pad
    transcendentals = n_pad * e * n_hidden
    bytes_accessed = (x_p.size * 2
                      + hidden_param_bytes
                      + (w_out.size * 2 + b_out.size * 4) * n_row_tiles   # re-streamed per i
                      + n_pad * out_pad * out_itemsize)

    kernel = functools.partial(_unembedder_kernel, num_hidden_layers)

    def _call(use_buffered):
        return pl.pallas_call(
            kernel,
            out_shape=jax.ShapeDtypeStruct((n_pad, out_pad), out_dtype),
            grid=grid,
            in_specs=_build_in_specs(use_buffered),
            out_specs=pl.BlockSpec((tr, tn), lambda i, j: (i, j)),
            scratch_shapes=[pltpu.VMEM((tr, e), jnp.bfloat16)],   # cached hidden activation
            compiler_params=pltpu.CompilerParams(
                dimension_semantics=("parallel", "arbitrary"),
                vmem_limit_bytes=vmem_limit,
            ),
            cost_estimate=pl.CostEstimate(
                flops=flops,
                transcendentals=transcendentals,
                bytes_accessed=bytes_accessed,
            ),
        )(x_p, *flat_params)

    try:
        y = _call(True)
    except Exception:
        # Compat safety net: older jax builds may reject pipeline_mode=pl.Buffered(...);
        # fall back to default double-buffering (correct, slightly more VMEM).
        y = _call(False)

    return {"outputs": y[:n, :out_dim].reshape(b, s, out_dim)}


def _reference_forward(inputs, params, num_hidden_layers):
    b, s, e = inputs.shape
    x = inputs.reshape(b * s, e).astype(jnp.float32)
    for li in range(num_hidden_layers - 1):
        x = x @ params[f"w{li}"] + params[f"b{li}"]
        mean = jnp.mean(x, axis=-1, keepdims=True)
        var = jnp.mean((x - mean) ** 2, axis=-1, keepdims=True)
        x = (x - mean) * jax.lax.rsqrt(var + 1e-5)
        x = x * params[f"g{li}"] + params[f"beta{li}"]
        x = _gelu_exact(x)
    y = x @ params["w_out"] + params["b_out"]
    return y.reshape(b, s, -1)


def init_params(key, embed_dim, out_dim, num_hidden_layers):
    params = {}
    for li in range(num_hidden_layers - 1):
        key, k1, k2 = jax.random.split(key, 3)
        params[f"w{li}"] = 0.02 * jax.random.normal(k1, (embed_dim, embed_dim), jnp.float32)
        params[f"b{li}"] = 0.01 * jax.random.normal(k2, (1, embed_dim), jnp.float32)
        params[f"g{li}"] = jnp.ones((1, embed_dim), jnp.float32)      # LayerNorm weight
        params[f"beta{li}"] = jnp.zeros((1, embed_dim), jnp.float32)  # LayerNorm bias
    key, k1, k2 = jax.random.split(key, 3)
    params["w_out"] = 0.02 * jax.random.normal(k1, (embed_dim, out_dim), jnp.float32)
    params["b_out"] = 0.01 * jax.random.normal(k2, (1, out_dim), jnp.float32)
    return params


if __name__ == "__main__":
    # Small shapes consistent with the module's forward: inputs (B, S, embed_dim).
    B, S = 2, 8
    EMBED_DIM, OUT_DIM = 32, 64
    NUM_HIDDEN_LAYERS = 2  # exercises Linear->LayerNorm->GELU hidden block + final Linear

    key = jax.random.PRNGKey(0)
    key, kx = jax.random.split(key)
    inputs = jax.random.normal(kx, (B, S, EMBED_DIM), jnp.float32)
    params = init_params(key, EMBED_DIM, OUT_DIM, NUM_HIDDEN_LAYERS)

    out = unembedder_forward(inputs, params, NUM_HIDDEN_LAYERS)
    y = jax.block_until_ready(out["outputs"])

    ref = _reference_forward(inputs, params, NUM_HIDDEN_LAYERS)
    assert y.shape == (B, S, OUT_DIM)
    # bf16 MXU inputs (f32 accumulation) vs. the pure-f32 reference -> relaxed tolerance.
    assert jnp.allclose(y, ref, atol=1e-2, rtol=1e-2), "mismatch vs. JAX reference"
    print("KERNEL_OK")
</pallas_src>

<mosaic_0001>
module attributes {stable_mosaic.version = 11 : i64} {
  func.func @_unembedder_kernel(%arg0: i32, %arg1: i32, %arg2: memref<16x32xbf16, #tpu.memory_space<vmem>>, %arg3: memref<32x32xbf16, #tpu.memory_space<vmem>>, %arg4: memref<1x32xf32, #tpu.memory_space<vmem>>, %arg5: memref<1x32xf32, #tpu.memory_space<vmem>>, %arg6: memref<1x32xf32, #tpu.memory_space<vmem>>, %arg7: memref<32x128xbf16, #tpu.memory_space<vmem>>, %arg8: memref<1x128xf32, #tpu.memory_space<vmem>>, %arg9: memref<16x128xf32, #tpu.memory_space<vmem>>, %arg10: memref<16x32xbf16, #tpu.memory_space<vmem>>) attributes {dimension_semantics = [#tpu.dimension_semantics<parallel>, #tpu.dimension_semantics<arbitrary>], iteration_bounds = array<i64: 1, 1>, scalar_prefetch = 0 : i64, scratch_operands = 1 : i64, tpu.core_type = #tpu.core_type<tc>, window_params = [{transform_indices = @transform_0, window_bounds = array<i64: 16, 32>}, {pipeline_mode = #tpu.pipeline_mode<synchronous>, transform_indices = @transform_1, window_bounds = array<i64: 32, 32>}, {pipeline_mode = #tpu.pipeline_mode<synchronous>, transform_indices = @transform_2, window_bounds = array<i64: 1, 32>}, {pipeline_mode = #tpu.pipeline_mode<synchronous>, transform_indices = @transform_3, window_bounds = array<i64: 1, 32>}, {pipeline_mode = #tpu.pipeline_mode<synchronous>, transform_indices = @transform_4, window_bounds = array<i64: 1, 32>}, {transform_indices = @transform_5, window_bounds = array<i64: 32, 128>}, {transform_indices = @transform_6, window_bounds = array<i64: 1, 128>}, {transform_indices = @transform_7, window_bounds = array<i64: 16, 128>}]} {
    %c0_i32 = arith.constant 0 : i32
    %0 = arith.cmpi eq, %arg1, %c0_i32 : i32
    %1 = arith.extui %0 : i1 to i32
    %c0_i32_0 = arith.constant 0 : i32
    %2 = arith.cmpi ne, %1, %c0_i32_0 : i32
    scf.if %2 {
      %c0_8 = arith.constant 0 : index
      %c0_9 = arith.constant 0 : index
      %10 = vector.load %arg2[%c0_8, %c0_9] : memref<16x32xbf16, #tpu.memory_space<vmem>>, vector<16x32xbf16>
      %c0_10 = arith.constant 0 : index
      %c0_11 = arith.constant 0 : index
      %11 = vector.load %arg3[%c0_10, %c0_11] : memref<32x32xbf16, #tpu.memory_space<vmem>>, vector<32x32xbf16>
      %cst_12 = arith.constant dense<0.000000e+00> : vector<16x32xf32>
      %12 = tpu.matmul %10, %11, %cst_12 {dimension_numbers = #tpu.dot_dimension_numbers<[1], [0], [0], [1], [0, 0, 1, 1], [], []>} : vector<16x32xbf16>, vector<32x32xbf16>, vector<16x32xf32> -> vector<16x32xf32>
      %c0_13 = arith.constant 0 : index
      %c0_14 = arith.constant 0 : index
      %13 = vector.load %arg4[%c0_13, %c0_14] : memref<1x32xf32, #tpu.memory_space<vmem>>, vector<1x32xf32>
      %14 = vector.broadcast %13 : vector<1x32xf32> to vector<16x32xf32>
      %15 = arith.addf %12, %14 : vector<16x32xf32>
      %cst_15 = arith.constant dense<0.000000e+00> : vector<16xf32>
      %16 = vector.multi_reduction <add>, %15, %cst_15 [1] : vector<16x32xf32> to vector<16xf32>
      %17 = vector.shape_cast %16 : vector<16xf32> to vector<16x1xf32>
      %cst_16 = arith.constant 3.125000e-02 : f32
      %18 = vector.broadcast %cst_16 : f32 to vector<16x1xf32>
      %19 = arith.mulf %17, %18 : vector<16x1xf32>
      %20 = arith.mulf %15, %15 : vector<16x32xf32>
      %cst_17 = arith.constant dense<0.000000e+00> : vector<16xf32>
      %21 = vector.multi_reduction <add>, %20, %cst_17 [1] : vector<16x32xf32> to vector<16xf32>
      %22 = vector.shape_cast %21 : vector<16xf32> to vector<16x1xf32>
      %cst_18 = arith.constant 3.125000e-02 : f32
      %23 = vector.broadcast %cst_18 : f32 to vector<16x1xf32>
      %24 = arith.mulf %22, %23 : vector<16x1xf32>
      %25 = arith.mulf %19, %19 : vector<16x1xf32>
      %26 = arith.subf %24, %25 : vector<16x1xf32>
      %cst_19 = arith.constant 0.000000e+00 : f32
      %27 = vector.broadcast %cst_19 : f32 to vector<16x1xf32>
      %28 = arith.maximumf %26, %27 : vector<16x1xf32>
      %29 = vector.broadcast %19 : vector<16x1xf32> to vector<16x32xf32>
      %30 = arith.subf %15, %29 : vector<16x32xf32>
      %cst_20 = arith.constant 9.99999974E-6 : f32
      %31 = vector.broadcast %cst_20 : f32 to vector<16x1xf32>
      %32 = arith.addf %28, %31 : vector<16x1xf32>
      %33 = math.rsqrt %32 : vector<16x1xf32>
      %34 = vector.broadcast %33 : vector<16x1xf32> to vector<16x32xf32>
      %35 = arith.mulf %30, %34 : vector<16x32xf32>
      %c0_21 = arith.constant 0 : index
      %c0_22 = arith.constant 0 : index
      %36 = vector.load %arg5[%c0_21, %c0_22] : memref<1x32xf32, #tpu.memory_space<vmem>>, vector<1x32xf32>
      %37 = vector.broadcast %36 : vector<1x32xf32> to vector<16x32xf32>
      %38 = arith.mulf %35, %37 : vector<16x32xf32>
      %c0_23 = arith.constant 0 : index
      %c0_24 = arith.constant 0 : index
      %39 = vector.load %arg6[%c0_23, %c0_24] : memref<1x32xf32, #tpu.memory_space<vmem>>, vector<1x32xf32>
      %40 = vector.broadcast %39 : vector<1x32xf32> to vector<16x32xf32>
      %41 = arith.addf %38, %40 : vector<16x32xf32>
      %cst_25 = arith.constant 5.000000e-01 : f32
      %42 = vector.broadcast %cst_25 : f32 to vector<16x32xf32>
      %43 = arith.mulf %42, %41 : vector<16x32xf32>
      %cst_26 = arith.constant 0.707106769 : f32
      %44 = vector.broadcast %cst_26 : f32 to vector<16x32xf32>
      %45 = arith.mulf %41, %44 : vector<16x32xf32>
      %46 = math.erf %45 : vector<16x32xf32>
      %cst_27 = arith.constant 1.000000e+00 : f32
      %47 = vector.broadcast %cst_27 : f32 to vector<16x32xf32>
      %48 = arith.addf %47, %46 : vector<16x32xf32>
      %49 = arith.mulf %43, %48 : vector<16x32xf32>
      %50 = arith.truncf %49 : vector<16x32xf32> to vector<16x32xbf16>
      %c0_28 = arith.constant 0 : index
      %c0_29 = arith.constant 0 : index
      %51 = vector.load %arg10[%c0_28, %c0_29] : memref<16x32xbf16, #tpu.memory_space<vmem>>, vector<16x32xbf16>
      tpu.vector_store %arg10[%c0_28, %c0_29], %50 {strides = array<i32>} : memref<16x32xbf16, #tpu.memory_space<vmem>>, vector<16x32xbf16>,
    } else {
    }
    %c0 = arith.constant 0 : index
    %c0_1 = arith.constant 0 : index
    %3 = vector.load %arg10[%c0, %c0_1] : memref<16x32xbf16, #tpu.memory_space<vmem>>, vector<16x32xbf16>
    %c0_2 = arith.constant 0 : index
    %c0_3 = arith.constant 0 : index
    %4 = vector.load %arg7[%c0_2, %c0_3] : memref<32x128xbf16, #tpu.memory_space<vmem>>, vector<32x128xbf16>
    %cst = arith.constant dense<0.000000e+00> : vector<16x128xf32>
    %5 = tpu.matmul %3, %4, %cst {dimension_numbers = #tpu.dot_dimension_numbers<[1], [0], [0], [1], [0, 0, 1, 1], [], []>} : vector<16x32xbf16>, vector<32x128xbf16>, vector<16x128xf32> -> vector<16x128xf32>
    %c0_4 = arith.constant 0 : index
    %c0_5 = arith.constant 0 : index
    %6 = vector.load %arg8[%c0_4, %c0_5] : memref<1x128xf32, #tpu.memory_space<vmem>>, vector<1x128xf32>
    %7 = vector.broadcast %6 : vector<1x128xf32> to vector<16x128xf32>
    %8 = arith.addf %5, %7 : vector<16x128xf32>
    %c0_6 = arith.constant 0 : index
    %c0_7 = arith.constant 0 : index
    %9 = vector.load %arg9[%c0_6, %c0_7] : memref<16x128xf32, #tpu.memory_space<vmem>>, vector<16x128xf32>
    tpu.vector_store %arg9[%c0_6, %c0_7], %8 {strides = array<i32>} : memref<16x128xf32, #tpu.memory_space<vmem>>, vector<16x128xf32>,
    return
  }
  func.func @transform_0(%arg0: i32, %arg1: i32) -> (i32, i32) {
    %c0_i32 = arith.constant 0 : i32
    %c0_i32_0 = arith.constant 0 : i32
    return %arg0, %c0_i32 : i32, i32
  }
  func.func @transform_1(%arg0: i32, %arg1: i32) -> (i32, i32) {
    %c0_i32 = arith.constant 0 : i32
    %c0_i32_0 = arith.constant 0 : i32
    %c0_i32_1 = arith.constant 0 : i32
    return %c0_i32, %c0_i32_0 : i32, i32
  }
  func.func @transform_2(%arg0: i32, %arg1: i32) -> (i32, i32) {
    %c0_i32 = arith.constant 0 : i32
    %c0_i32_0 = arith.constant 0 : i32
    %c0_i32_1 = arith.constant 0 : i32
    return %c0_i32, %c0_i32_0 : i32, i32
  }
  func.func @transform_3(%arg0: i32, %arg1: i32) -> (i32, i32) {
    %c0_i32 = arith.constant 0 : i32
    %c0_i32_0 = arith.constant 0 : i32
    %c0_i32_1 = arith.constant 0 : i32
    return %c0_i32, %c0_i32_0 : i32, i32
  }
  func.func @transform_4(%arg0: i32, %arg1: i32) -> (i32, i32) {
    %c0_i32 = arith.constant 0 : i32
    %c0_i32_0 = arith.constant 0 : i32
    %c0_i32_1 = arith.constant 0 : i32
    return %c0_i32, %c0_i32_0 : i32, i32
  }
  func.func @transform_5(%arg0: i32, %arg1: i32) -> (i32, i32) {
    %c0_i32 = arith.constant 0 : i32
    %c0_i32_0 = arith.constant 0 : i32
    return %c0_i32, %arg1 : i32, i32
  }
  func.func @transform_6(%arg0: i32, %arg1: i32) -> (i32, i32) {
    %c0_i32 = arith.constant 0 : i32
    %c0_i32_0 = arith.constant 0 : i32
    return %c0_i32, %arg1 : i32, i32
  }
  func.func @transform_7(%arg0: i32, %arg1: i32) -> (i32, i32) {
    %c0_i32 = arith.constant 0 : i32
    return %arg0, %arg1 : i32, i32
  }
}

module attributes {stable_mosaic.version = 11 : i64} {
  func.func @_unembedder_kernel(%arg0: i32, %arg1: i32, %arg2: memref<16x32xbf16, #tpu.memory_space<vmem>>, %arg3: memref<32x32xbf16, #tpu.memory_space<vmem>>, %arg4: memref<1x32xf32, #tpu.memory_space<vmem>>, %arg5: memref<1x32xf32, #tpu.memory_space<vmem>>, %arg6: memref<1x32xf32, #tpu.memory_space<vmem>>, %arg7: memref<32x128xbf16, #tpu.memory_space<vmem>>, %arg8: memref<1x128xf32, #tpu.memory_space<vmem>>, %arg9: memref<16x128xf32, #tpu.memory_space<vmem>>, %arg10: memref<16x32xbf16, #tpu.memory_space<vmem>>) attributes {dimension_semantics = [#tpu.dimension_semantics<parallel>, #tpu.dimension_semantics<arbitrary>], iteration_bounds = array<i64: 1, 1>, scalar_prefetch = 0 : i64, scratch_operands = 1 : i64, tpu.core_type = #tpu.core_type<tc>, window_params = [{transform_indices = @transform_0, window_bounds = array<i64: 16, 32>}, {pipeline_mode = #tpu.pipeline_mode<synchronous>, transform_indices = @transform_1, window_bounds = array<i64: 32, 32>}, {pipeline_mode = #tpu.pipeline_mode<synchronous>, transform_indices = @transform_2, window_bounds = array<i64: 1, 32>}, {pipeline_mode = #tpu.pipeline_mode<synchronous>, transform_indices = @transform_3, window_bounds = array<i64: 1, 32>}, {pipeline_mode = #tpu.pipeline_mode<synchronous>, transform_indices = @transform_4, window_bounds = array<i64: 1, 32>}, {transform_indices = @transform_5, window_bounds = array<i64: 32, 128>}, {transform_indices = @transform_6, window_bounds = array<i64: 1, 128>}, {transform_indices = @transform_7, window_bounds = array<i64: 16, 128>}]} {
    %c0_i32 = arith.constant 0 : i32
    %0 = arith.cmpi eq, %arg1, %c0_i32 : i32
    %1 = arith.extui %0 : i1 to i32
    %c0_i32_0 = arith.constant 0 : i32
    %2 = arith.cmpi ne, %1, %c0_i32_0 : i32
    scf.if %2 {
      %c0_8 = arith.constant 0 : index
      %c0_9 = arith.constant 0 : index
      %10 = vector.load %arg2[%c0_8, %c0_9] : memref<16x32xbf16, #tpu.memory_space<vmem>>, vector<16x32xbf16>
      %c0_10 = arith.constant 0 : index
      %c0_11 = arith.constant 0 : index
      %11 = vector.load %arg3[%c0_10, %c0_11] : memref<32x32xbf16, #tpu.memory_space<vmem>>, vector<32x32xbf16>
      %cst_12 = arith.constant dense<0.000000e+00> : vector<16x32xf32>
      %12 = tpu.matmul %10, %11, %cst_12 {dimension_numbers = #tpu.dot_dimension_numbers<[1], [0], [0], [1], [0, 0, 1, 1], [], []>} : vector<16x32xbf16>, vector<32x32xbf16>, vector<16x32xf32> -> vector<16x32xf32>
      %c0_13 = arith.constant 0 : index
      %c0_14 = arith.constant 0 : index
      %13 = vector.load %arg4[%c0_13, %c0_14] : memref<1x32xf32, #tpu.memory_space<vmem>>, vector<1x32xf32>
      %14 = vector.broadcast %13 : vector<1x32xf32> to vector<16x32xf32>
      %15 = arith.addf %12, %14 : vector<16x32xf32>
      %cst_15 = arith.constant dense<0.000000e+00> : vector<16xf32>
      %16 = vector.multi_reduction <add>, %15, %cst_15 [1] : vector<16x32xf32> to vector<16xf32>
      %17 = vector.shape_cast %16 : vector<16xf32> to vector<16x1xf32>
      %cst_16 = arith.constant 3.125000e-02 : f32
      %18 = vector.broadcast %cst_16 : f32 to vector<16x1xf32>
      %19 = arith.mulf %17, %18 : vector<16x1xf32>
      %20 = arith.mulf %15, %15 : vector<16x32xf32>
      %cst_17 = arith.constant dense<0.000000e+00> : vector<16xf32>
      %21 = vector.multi_reduction <add>, %20, %cst_17 [1] : vector<16x32xf32> to vector<16xf32>
      %22 = vector.shape_cast %21 : vector<16xf32> to vector<16x1xf32>
      %cst_18 = arith.constant 3.125000e-02 : f32
      %23 = vector.broadcast %cst_18 : f32 to vector<16x1xf32>
      %24 = arith.mulf %22, %23 : vector<16x1xf32>
      %25 = arith.mulf %19, %19 : vector<16x1xf32>
      %26 = arith.subf %24, %25 : vector<16x1xf32>
      %cst_19 = arith.constant 0.000000e+00 : f32
      %27 = vector.broadcast %cst_19 : f32 to vector<16x1xf32>
      %28 = arith.maximumf %26, %27 : vector<16x1xf32>
      %29 = vector.broadcast %19 : vector<16x1xf32> to vector<16x32xf32>
      %30 = arith.subf %15, %29 : vector<16x32xf32>
      %cst_20 = arith.constant 9.99999974E-6 : f32
      %31 = vector.broadcast %cst_20 : f32 to vector<16x1xf32>
      %32 = arith.addf %28, %31 : vector<16x1xf32>
      %33 = math.rsqrt %32 : vector<16x1xf32>
      %34 = vector.broadcast %33 : vector<16x1xf32> to vector<16x32xf32>
      %35 = arith.mulf %30, %34 : vector<16x32xf32>
      %c0_21 = arith.constant 0 : index
      %c0_22 = arith.constant 0 : index
      %36 = vector.load %arg5[%c0_21, %c0_22] : memref<1x32xf32, #tpu.memory_space<vmem>>, vector<1x32xf32>
      %37 = vector.broadcast %36 : vector<1x32xf32> to vector<16x32xf32>
      %38 = arith.mulf %35, %37 : vector<16x32xf32>
      %c0_23 = arith.constant 0 : index
      %c0_24 = arith.constant 0 : index
      %39 = vector.load %arg6[%c0_23, %c0_24] : memref<1x32xf32, #tpu.memory_space<vmem>>, vector<1x32xf32>
      %40 = vector.broadcast %39 : vector<1x32xf32> to vector<16x32xf32>
      %41 = arith.addf %38, %40 : vector<16x32xf32>
      %cst_25 = arith.constant 5.000000e-01 : f32
      %42 = vector.broadcast %cst_25 : f32 to vector<16x32xf32>
      %43 = arith.mulf %42, %41 : vector<16x32xf32>
      %cst_26 = arith.constant 0.707106769 : f32
      %44 = vector.broadcast %cst_26 : f32 to vector<16x32xf32>
      %45 = arith.mulf %41, %44 : vector<16x32xf32>
      %46 = math.erf %45 : vector<16x32xf32>
      %cst_27 = arith.constant 1.000000e+00 : f32
      %47 = vector.broadcast %cst_27 : f32 to vector<16x32xf32>
      %48 = arith.addf %47, %46 : vector<16x32xf32>
      %49 = arith.mulf %43, %48 : vector<16x32xf32>
      %50 = arith.truncf %49 : vector<16x32xf32> to vector<16x32xbf16>
      %c0_28 = arith.constant 0 : index
      %c0_29 = arith.constant 0 : index
      %51 = vector.load %arg10[%c0_28, %c0_29] : memref<16x32xbf16, #tpu.memory_space<vmem>>, vector<16x32xbf16>
      tpu.vector_store %arg10[%c0_28, %c0_29], %50 {strides = array<i32>} : memref<16x32xbf16, #tpu.memory_space<vmem>>, vector<16x32xbf16>,
    } else {
    }
    %c0 = arith.constant 0 : index
    %c0_1 = arith.constant 0 : index
    %3 = vector.load %arg10[%c0, %c0_1] : memref<16x32xbf16, #tpu.memory_space<vmem>>, vector<16x32xbf16>
    %c0_2 = arith.constant 0 : index
    %c0_3 = arith.constant 0 : index
    %4 = vector.load %arg7[%c0_2, %c0_3] : memref<32x128xbf16, #tpu.memory_space<vmem>>, vector<32x128xbf16>
    %cst = arith.constant dense<0.000000e+00> : vector<16x128xf32>
    %5 = tpu.matmul %3, %4, %cst {dimension_numbers = #tpu.dot_dimension_numbers<[1], [0], [0], [1], [0, 0, 1, 1], [], []>} : vector<16x32xbf16>, vector<32x128xbf16>, vector<16x128xf32> -> vector<16x128xf32>
    %c0_4 = arith.constant 0 : index
    %c0_5 = arith.constant 0 : index
    %6 = vector.load %arg8[%c0_4, %c0_5] : memref<1x128xf32, #tpu.memory_space<vmem>>, vector<1x128xf32>
    %7 = vector.broadcast %6 : vector<1x128xf32> to vector<16x128xf32>
    %8 = arith.addf %5, %7 : vector<16x128xf32>
    %c0_6 = arith.constant 0 : index
    %c0_7 = arith.constant 0 : index
    %9 = vector.load %arg9[%c0_6, %c0_7] : memref<16x128xf32, #tpu.memory_space<vmem>>, vector<16x128xf32>
    tpu.vector_store %arg9[%c0_6, %c0_7], %8 {strides = array<i32>} : memref<16x128xf32, #tpu.memory_space<vmem>>, vector<16x128xf32>,
    return
  }
  func.func @transform_0(%arg0: i32, %arg1: i32) -> (i32, i32) {
    %c0_i32 = arith.constant 0 : i32
    %c0_i32_0 = arith.constant 0 : i32
    return %arg0, %c0_i32 : i32, i32
  }
  func.func @transform_1(%arg0: i32, %arg1: i32) -> (i32, i32) {
    %c0_i32 = arith.constant 0 : i32
    %c0_i32_0 = arith.constant 0 : i32
    %c0_i32_1 = arith.constant 0 : i32
    return %c0_i32, %c0_i32_0 : i32, i32
  }
  func.func @transform_2(%arg0: i32, %arg1: i32) -> (i32, i32) {
    %c0_i32 = arith.constant 0 : i32
    %c0_i32_0 = arith.constant 0 : i32
    %c0_i32_1 = arith.constant 0 : i32
    return %c0_i32, %c0_i32_0 : i32, i32
  }
  func.func @transform_3(%arg0: i32, %arg1: i32) -> (i32, i32) {
    %c0_i32 = arith.constant 0 : i32
    %c0_i32_0 = arith.constant 0 : i32
    %c0_i32_1 = arith.constant 0 : i32
    return %c0_i32, %c0_i32_0 : i32, i32
  }
  func.func @transform_4(%arg0: i32, %arg1: i32) -> (i32, i32) {
    %c0_i32 = arith.constant 0 : i32
    %c0_i32_0 = arith.constant 0 : i32
    %c0_i32_1 = arith.constant 0 : i32
    return %c0_i32, %c0_i32_0 : i32, i32
  }
  func.func @transform_5(%arg0: i32, %arg1: i32) -> (i32, i32) {
    %c0_i32 = arith.constant 0 : i32
    %c0_i32_0 = arith.constant 0 : i32
    return %c0_i32, %arg1 : i32, i32
  }
  func.func @transform_6(%arg0: i32, %arg1: i32) -> (i32, i32) {
    %c0_i32 = arith.constant 0 : i32
    %c0_i32_0 = arith.constant 0 : i32
    return %c0_i32, %arg1 : i32, i32
  }
  func.func @transform_7(%arg0: i32, %arg1: i32) -> (i32, i32) {
    %c0_i32 = arith.constant 0 : i32
    return %arg0, %arg1 : i32, i32
  }
}

</mosaic_0001>

<llo_original>
// kernel: tpu_custom_call.1
$region0: #{tpu_custom_call.1}
  #allocation0 [shape = 'u32[]', space=smem, size = 0x4, offset = 0x4, fixed_abs, tag = 'smem constant byte address 0x4 - core index']
  #allocation1 [shape = 'u32[72,128]{1,0:T(1,128)}', space=vmem, size = 0x9000, scoped, tag = 'internal scratch']
  #allocation2 [shape = 'bf16[16,32]{1,0:T(8,128)(2,1)}', space=vmem, size = 0x1000, scoped, tag = 'scratch operand']
  %s0 = inlined_call_operand.hbm [shape: bf16[16,32], index: 0, kind: input, shape index: {}]
  %s1 = inlined_call_operand.hbm [shape: bf16[32,32], index: 1, kind: input, shape index: {}]
  %s2 = inlined_call_operand.vmem [shape: f32[1,32], index: 2, kind: input, shape index: {}]
  %s3 = inlined_call_operand.vmem [shape: f32[1,32], index: 3, kind: input, shape index: {}]
  %s4 = inlined_call_operand.vmem [shape: f32[1,32], index: 4, kind: input, shape index: {}]
  %s5 = inlined_call_operand.hbm [shape: bf16[32,128], index: 5, kind: input, shape index: {}]
  %s6 = inlined_call_operand.vmem [shape: f32[1,128], index: 6, kind: input, shape index: {}]
  %s7 = inlined_call_operand.hbm [shape: f32[16,128], index: 7, kind: output, shape index: {}]
  %s8 = sld [smem:[#allocation0]]
  $region54: #{tpu_custom_call.1} parent=0
    _
  %s10 = ssub.s32 1, %s8
  %s11 = scalar_select 0, %s10, %s8
  $region1: #{tpu_custom_call.1} parent=0
    #allocation3 [shape = 'u8[4096]{0}', space=vmem, size = 0x1000, scoped, tag = 'input window, operand 0, single buffered']
    #allocation4 [shape = 's32[1]{0}', space=sflag, size = 0x4, scoped, tag = 'scoped memory for tpu_custom_call.1']
    #allocation5 [shape = 's32[1]{0}', space=sflag, size = 0x4, scoped, tag = 'scoped memory for tpu_custom_call.1']
    #allocation6 [shape = 'u8[8192]{0}', space=vmem, size = 0x2000, scoped, tag = 'input window, operand 1, single buffered']
    #allocation7 [shape = 's32[1]{0}', space=sflag, size = 0x4, scoped, tag = 'scoped memory for tpu_custom_call.1']
    #allocation8 [shape = 'u8[8192]{0}', space=vmem, size = 0x2000, scoped, tag = 'input window, operand 5, single buffered']
    #allocation9 [shape = 'u8[8192]{0}', space=vmem, size = 0x2000, scoped, tag = 'output window, operand 0, single buffered']
    %12 = vsyncpa [#allocation4], 0
    %13 = vsyncpa [#allocation7], 0
    %14 = vsyncpa [#allocation5], 0
    // Predicated region
    $region2: #{tpu_custom_call.1} parent=1 // pred_check
      _
    $region3: #{tpu_custom_call.1} parent=1 // pred_check_branch
      %16 = sbr.rel (0) target = $region5
    $region4: #{tpu_custom_call.1} parent=1 // pred_region
      %18 = vsyncadd [#allocation4], 0
      %s19 = sshll.u32 %s0, 4
      %s20 = int_to_ptr.hbm [resolvable:$true] %s19
      %s21 = sshll.u32 [#allocation3], 4
      %s22 = int_to_ptr.vmem [resolvable:$true] %s21
      %27 = dma.hbm_to_vmem [thread:$0]  %s20, 128, %s22, [#allocation4], 64, 64, 4
    $region5: #{tpu_custom_call.1} parent=1 // pred_fallthru
      _
    // Predicated region
    $region6: #{tpu_custom_call.1} parent=1 // pred_check
      _
    $region7: #{tpu_custom_call.1} parent=1 // pred_check_branch
      %29 = sbr.rel (0) target = $region9
    $region8: #{tpu_custom_call.1} parent=1 // pred_region
      %31 = vsyncadd [#allocation7], 0
      %s32 = sshll.u32 %s1, 4
      %s33 = int_to_ptr.hbm [resolvable:$true] %s32
      %s34 = sshll.u32 [#allocation6], 4
      %s35 = int_to_ptr.vmem [resolvable:$true] %s34
      %40 = dma.hbm_to_vmem [thread:$0]  %s33, 256, %s35, [#allocation7], 64, 64, 4
    $region9: #{tpu_custom_call.1} parent=1 // pred_fallthru
      _
    // Predicated region
    $region10: #{tpu_custom_call.1} parent=1 // pred_check
      _
    $region11: #{tpu_custom_call.1} parent=1 // pred_check_branch
      %42 = sbr.rel (0) target = $region13
    $region12: #{tpu_custom_call.1} parent=1 // pred_region
      _
    $region13: #{tpu_custom_call.1} parent=1 // pred_fallthru
      _
    // Predicated region
    $region14: #{tpu_custom_call.1} parent=1 // pred_check
      _
    $region15: #{tpu_custom_call.1} parent=1 // pred_check_branch
      %44 = sbr.rel (0) target = $region17
    $region16: #{tpu_custom_call.1} parent=1 // pred_region
      _
    $region17: #{tpu_custom_call.1} parent=1 // pred_fallthru
      _
    // Predicated region
    $region18: #{tpu_custom_call.1} parent=1 // pred_check
      _
    $region19: #{tpu_custom_call.1} parent=1 // pred_check_branch
      %46 = sbr.rel (0) target = $region21
    $region20: #{tpu_custom_call.1} parent=1 // pred_region
      _
    $region21: #{tpu_custom_call.1} parent=1 // pred_fallthru
      _
    // Predicated region
    $region22: #{tpu_custom_call.1} parent=1 // pred_check
      _
    $region23: #{tpu_custom_call.1} parent=1 // pred_check_branch
      %48 = sbr.rel (0) target = $region25
    $region24: #{tpu_custom_call.1} parent=1 // pred_region
      %50 = vsyncadd [#allocation7], 0
      %s51 = sshll.u32 %s5, 4
      %s52 = int_to_ptr.hbm [resolvable:$true] %s51
      %s53 = sshll.u32 [#allocation8], 4
      %s54 = int_to_ptr.vmem [resolvable:$true] %s53
      %59 = dma.hbm_to_vmem [thread:$0]  %s52, 256, %s54, [#allocation7], 64, 64, 4
    $region25: #{tpu_custom_call.1} parent=1 // pred_fallthru
      _
    // Predicated region
    $region26: #{tpu_custom_call.1} parent=1 // pred_check
      _
    $region27: #{tpu_custom_call.1} parent=1 // pred_check_branch
      %61 = sbr.rel (0) target = $region29
    $region28: #{tpu_custom_call.1} parent=1 // pred_region
      _
    $region29: #{tpu_custom_call.1} parent=1 // pred_fallthru
      _
    // Predicated region
    $region30: #{tpu_custom_call.1} parent=1 // pred_check
      _
    $region31: #{tpu_custom_call.1} parent=1 // pred_check_branch
      %63 = sbr.rel (0) target = $region33
    $region32: #{tpu_custom_call.1} parent=1 // pred_region
      %65 = dma.done [#allocation4], 128
    $region33: #{tpu_custom_call.1} parent=1 // pred_fallthru
      _
    // Predicated region
    $region34: #{tpu_custom_call.1} parent=1 // pred_check
      _
    $region35: #{tpu_custom_call.1} parent=1 // pred_check_branch
      %67 = sbr.rel (0) target = $region37
    $region36: #{tpu_custom_call.1} parent=1 // pred_region
      %69 = dma.done [#allocation7], 256
    $region37: #{tpu_custom_call.1} parent=1 // pred_fallthru
      _
    // Predicated region
    $region38: #{tpu_custom_call.1} parent=1 // pred_check
      _
    $region39: #{tpu_custom_call.1} parent=1 // pred_check_branch
      %71 = sbr.rel (0) target = $region41
    $region40: #{tpu_custom_call.1} parent=1 // pred_region
      %73 = dma.done [#allocation7], 256
    $region41: #{tpu_custom_call.1} parent=1 // pred_fallthru
      _
    %p75 = scmp.eq.s32.totalorder 0, 0
    // Predicated region
    $region42: #{tpu_custom_call.1} parent=1 // pred_check
      %p76 = pneg %p75
    $region43: #{tpu_custom_call.1} parent=1 // pred_check_branch
      %78 = sbr.rel (%p76) target = $region45
    $region44: #{tpu_custom_call.1} parent=1 // pred_region
      %v79 = vld [vmem:[#allocation3] sm:$0xf]
      %v80 = vld [vmem:[#allocation3 + $0x4] sm:$0xf]
      %v81 = vld [vmem:[#allocation6] sm:$0xf]
      %v82 = vld [vmem:[#allocation6 + $0x4] sm:$0xf]
      %v83 = vld [vmem:[#allocation6 + $0x8] sm:$0xf]
      %v84 = vld [vmem:[#allocation6 + $0xc] sm:$0xf]
      %v85 = vld [vmem:[%s2] sm:$0x1]
      %v87 = vperm.slane %v85, 0
      %v91 = vunpack.c.l.b16 %v79
      %v92 = vunpack.c.l.b16 %v80
      %v93 = vpack.c.b16 %v92, %v91
      %v98 = vunpack.c.l.b16 %v81
      %v99 = vunpack.c.l.b16 %v82
      %v100 = vunpack.c.l.b16 %v83
      %v101 = vunpack.c.l.b16 %v84
      %v102 = vpack.c.b16 %v99, %v98
      %v103 = vpack.c.b16 %v101, %v100
      %vm106 = vcmask 261120
      %v108 = vsel %vm106, %v93, 0
      %110 = vmatpush.bf16.msra.mxu0 0
      %111 = vmatpush.bf16.msra.mxu0 0
      %112 = vmatpush.bf16.msra.mxu0 0
      %113 = vmatpush.bf16.msra.mxu0 0
      %114 = vmatpush.bf16.msra.mxu0 0
      %115 = vmatpush.bf16.msra.mxu0 0
      %116 = vmatpush.bf16.msra.mxu0 %v103
      %117 = vmatpush.bf16.msra.mxu0 %v102
      %118 = vmatmul.bf16.gmra.mxu0 %v108
      %v119 = vpop.f32.mrf.mxu0
      %v120 = vadd.f32 %v87, %v119
      %v121 = vpop.f32.mrf.mxu0
      %v122 = vadd.f32 %v87, %v121
      %123 = vdwg.mxu0
      %v124 = vsel %vm106, %v120, 0.0
      %125 = vadd.xlane.f32.xlu0 %v124
      %v126 = vpop.xlane.xlu0 %125
      %v127 = vsel %vm106, %v122, 0.0
      %128 = vadd.xlane.f32.xlu0 %v127
      %v129 = vpop.xlane.xlu0 %128
      %v130 = vmul.f32 %v126, 0.03125
      %v131 = vmul.f32 %v129, 0.03125
      %v132 = vmul.f32 %v120, %v120
      %v133 = vmul.f32 %v122, %v122
      %v134 = vsel %vm106, %v132, 0.0
      %135 = vadd.xlane.f32.xlu0 %v134
      %v136 = vpop.xlane.xlu0 %135
      %v137 = vsel %vm106, %v133, 0.0
      %138 = vadd.xlane.f32.xlu0 %v137
      %v139 = vpop.xlane.xlu0 %138
      %v140 = vmul.f32 %v136, 0.03125
      %v141 = vmul.f32 %v139, 0.03125
      %v142 = vmul.f32 %v130, %v130
      %v143 = vmul.f32 %v131, %v131
      %v144 = vsub.f32 %v140, %v142
      %v145 = vsub.f32 %v141, %v143
      %v146 = vmax.f32 %v144, 0.0
      %v147 = vmax.f32 %v145, 0.0
      %v148 = vsub.f32 %v120, %v130
      %v149 = vsub.f32 %v122, %v131
      %v150 = vadd.f32 %v146, 1e-05
      %v151 = vadd.f32 %v147, 1e-05
      %v152 = vrsqrt.pop %v150
      %v153 = vmul.f32 %v152, %v150
      %v154 = vmul.f32 %v153, %v152
      %v155 = vmul.f32 0.5, %v154
      %v156 = vsub.f32 1.5, %v155
      %v157 = vmul.f32 %v152, %v156
      %vm158 = vweird.f32 %v150
      %vm159 = vweird.f32 %v152
      %vm160 = vmor %vm158, %vm159
      %v161 = vsel %vm160, %v152, %v157
      %v162 = vrsqrt.pop %v151
      %v163 = vmul.f32 %v162, %v151
      %v164 = vmul.f32 %v163, %v162
      %v165 = vmul.f32 0.5, %v164
      %v166 = vsub.f32 1.5, %v165
      %v167 = vmul.f32 %v162, %v166
      %vm168 = vweird.f32 %v151
      %vm169 = vweird.f32 %v162
      %vm170 = vmor %vm168, %vm169
      %v171 = vsel %vm170, %v162, %v167
      %v172 = vmul.f32 %v148, %v161
      %v173 = vmul.f32 %v149, %v171
      %v174 = vld [vmem:[%s3] sm:$0x1]
      %v176 = vperm.slane %v174, 0
      %v178 = vmul.f32 %v172, %v176
      %v179 = vmul.f32 %v173, %v176
      %v180 = vld [vmem:[%s4] sm:$0x1]
      %v182 = vperm.slane %v180, 0
      %v184 = vadd.f32 %v178, %v182
      %v185 = vadd.f32 %v179, %v182
      %v186 = vmul.f32 %v184, 0.5
      %v187 = vmul.f32 %v185, 0.5
      %v188 = vmul.f32 %v184, 0.70710677
      %v189 = vmul.f32 %v185, 0.70710677
      %v190 = vmul.f32 %v188, %v188
      %v191 = vmin.f32 16.0, %v190
      %v192 = vmul.f32 %v191, 2.1237322e-06
      %v193 = vadd.f32 %v192, 0.00028619796
      %v194 = vmul.f32 %v191, %v193
      %v195 = vadd.f32 %v194, 0.0036580483
      %v196 = vmul.f32 %v191, %v195
      %v197 = vadd.f32 %v196, 0.05243302
      %v198 = vmul.f32 %v191, %v197
      %v199 = vadd.f32 %v198, 0.18741608
      %v200 = vmul.f32 %v191, %v199
      %v201 = vadd.f32 %v200, 1.1283791
      %v202 = vmul.f32 %v188, %v201
      %v203 = vmul.f32 %v191, 3.8918573e-05
      %v204 = vadd.f32 %v203, 0.001143296
      %v205 = vmul.f32 %v191, %v204
      %v206 = vadd.f32 %v205, 0.014752088
      %v207 = vmul.f32 %v191, %v206
      %v208 = vadd.f32 %v207, 0.112945676
      %v209 = vmul.f32 %v191, %v208
      %v210 = vadd.f32 %v209, 0.4994258
      %v211 = vmul.f32 %v191, %v210
      %v212 = vadd.f32 %v211, 1.0
      %v213 = vrcp.pop %v212
      %v214 = vmul.f32 %v212, %v213
      %v215 = vsub.f32 1.0, %v214
      %v216 = vmul.f32 %v213, %v215
      %v217 = vadd.f32 %v213, %v216
      %vm218 = vweird.f32 %v212
      %vm219 = vweird.f32 %v213
      %vm220 = vmor %vm218, %vm219
      %v221 = vsel %vm220, %v213, %v217
      %v222 = vand.u32 2147483647, %v212
      %vm223 = vcmp.eq.f32.partialorder %v222, 8.507059e+37
      %v224 = vand.u32 %v212, 2147483648
      %v225 = vor.u32 1.1754944e-38, %v224
      %v226 = vsel %vm223, %v225, %v221
      %v227 = vmul.f32 %v202, %v226
      %v228 = vmin.f32 %v227, 1.0
      %v229 = vmax.f32 %v228, -1.0
      %v230 = vmul.f32 %v189, %v189
      %v231 = vmin.f32 16.0, %v230
      %v232 = vmul.f32 %v231, 2.1237322e-06
      %v233 = vadd.f32 %v232, 0.00028619796
      %v234 = vmul.f32 %v231, %v233
      %v235 = vadd.f32 %v234, 0.0036580483
      %v236 = vmul.f32 %v231, %v235
      %v237 = vadd.f32 %v236, 0.05243302
      %v238 = vmul.f32 %v231, %v237
      %v239 = vadd.f32 %v238, 0.18741608
      %v240 = vmul.f32 %v231, %v239
      %v241 = vadd.f32 %v240, 1.1283791
      %v242 = vmul.f32 %v189, %v241
      %v243 = vmul.f32 %v231, 3.8918573e-05
      %v244 = vadd.f32 %v243, 0.001143296
      %v245 = vmul.f32 %v231, %v244
      %v246 = vadd.f32 %v245, 0.014752088
      %v247 = vmul.f32 %v231, %v246
      %v248 = vadd.f32 %v247, 0.112945676
      %v249 = vmul.f32 %v231, %v248
      %v250 = vadd.f32 %v249, 0.4994258
      %v251 = vmul.f32 %v231, %v250
      %v252 = vadd.f32 %v251, 1.0
      %v253 = vrcp.pop %v252
      %v254 = vmul.f32 %v252, %v253
      %v255 = vsub.f32 1.0, %v254
      %v256 = vmul.f32 %v253, %v255
      %v257 = vadd.f32 %v253, %v256
      %vm258 = vweird.f32 %v252
      %vm259 = vweird.f32 %v253
      %vm260 = vmor %vm258, %vm259
      %v261 = vsel %vm260, %v253, %v257
      %v262 = vand.u32 2147483647, %v252
      %vm263 = vcmp.eq.f32.partialorder %v262, 8.507059e+37
      %v264 = vand.u32 %v252, 2147483648
      %v265 = vor.u32 1.1754944e-38, %v264
      %v266 = vsel %vm263, %v265, %v261
      %v267 = vmul.f32 %v242, %v266
      %v268 = vmin.f32 %v267, 1.0
      %v269 = vmax.f32 %v268, -1.0
      %v270 = vadd.f32 %v229, 1.0
      %v271 = vadd.f32 %v269, 1.0
      %v272 = vmul.f32 %v186, %v270
      %v273 = vmul.f32 %v187, %v271
      %v274 = vpack.c.bf16 %v272, %v272
      %v275 = vpack.c.bf16 %v273, %v273
      %vm276 = vcmask 257024
      %277 = vst.msk [vmem:[#allocation2] sm:$0xf] %vm276, %v274
      %278 = vst.msk [vmem:[#allocation2 + $0x4] sm:$0xf] %vm276, %v275
    $region45: #{tpu_custom_call.1} parent=1 // pred_fallthru
      _
    %v279 = vld [vmem:[#allocation2] sm:$0xf]
    %v280 = vld [vmem:[#allocation2 + $0x4] sm:$0xf]
    %v281 = vld [vmem:[#allocation8] sm:$0xf]
    %v282 = vld [vmem:[#allocation8 + $0x4] sm:$0xf]
    %v283 = vld [vmem:[#allocation8 + $0x8] sm:$0xf]
    %v284 = vld [vmem:[#allocation8 + $0xc] sm:$0xf]
    %v285 = vld [vmem:[%s6] sm:$0x1]
    %v287 = vperm.slane %v285, 0
    %v291 = vunpack.c.l.b16 %v279
    %v292 = vunpack.c.l.b16 %v280
    %v293 = vpack.c.b16 %v292, %v291
    %v298 = vunpack.c.l.b16 %v281
    %v299 = vunpack.c.l.b16 %v282
    %v300 = vunpack.c.l.b16 %v283
    %v301 = vunpack.c.l.b16 %v284
    %v302 = vpack.c.b16 %v299, %v298
    %v303 = vpack.c.b16 %v301, %v300
    %vm306 = vcmask 261120
    %v308 = vsel %vm306, %v293, 0
    %310 = vmatpush.bf16.msra.mxu0 0
    %311 = vmatpush.bf16.msra.mxu0 0
    %312 = vmatpush.bf16.msra.mxu0 0
    %313 = vmatpush.bf16.msra.mxu0 0
    %314 = vmatpush.bf16.msra.mxu0 0
    %315 = vmatpush.bf16.msra.mxu0 0
    %316 = vmatpush.bf16.msra.mxu0 %v303
    %317 = vmatpush.bf16.msra.mxu0 %v302
    %318 = vmatmul.bf16.gmra.mxu0 %v308
    %v319 = vpop.f32.mrf.mxu0
    %v320 = vadd.f32 %v287, %v319
    %v321 = vpop.f32.mrf.mxu0
    %v322 = vadd.f32 %v287, %v321
    %323 = vdwg.mxu0
    %324 = vst [vmem:[#allocation9] sm:$0xff] %v320
    %325 = vst [vmem:[#allocation9 + $0x8] sm:$0xff] %v322
    // Predicated region
    $region46: #{tpu_custom_call.1} parent=1 // pred_check
      _
    $region47: #{tpu_custom_call.1} parent=1 // pred_check_branch
      %327 = sbr.rel (0) target = $region49
    $region48: #{tpu_custom_call.1} parent=1 // pred_region
      %329 = vsyncadd [#allocation5], 0
      %s330 = sshll.u32 [#allocation9], 4
      %s331 = int_to_ptr.vmem [resolvable:$true] %s330
      %s332 = sshll.u32 %s7, 4
      %s333 = int_to_ptr.hbm [resolvable:$true] %s332
      %338 = dma.vmem_to_hbm [thread:$0]  %s331, 256, %s333, [#allocation5], 128, 128, 8
    $region49: #{tpu_custom_call.1} parent=1 // pred_fallthru
      _
    // Predicated region
    $region50: #{tpu_custom_call.1} parent=1 // pred_check
      _
    $region51: #{tpu_custom_call.1} parent=1 // pred_check_branch
      %340 = sbr.rel (0) target = $region53
    $region52: #{tpu_custom_call.1} parent=1 // pred_region
      %342 = dma.done [#allocation5], 256
    $region53: #{tpu_custom_call.1} parent=1 // pred_fallthru
      _
    %343 = vsyncpa [#allocation4], 1
    %344 = vsyncpa [#allocation7], 1
    %345 = vsyncpa [#allocation5], 1

// kernel: tpu_custom_call.1
$region0: #{tpu_custom_call.1}
  #allocation0 [shape = 'u32[]', space=smem, size = 0x4, offset = 0x4, fixed_abs, tag = 'smem constant byte address 0x4 - core index']
  #allocation1 [shape = 'u32[72,128]{1,0:T(1,128)}', space=vmem, size = 0x9000, scoped, tag = 'internal scratch']
  #allocation2 [shape = 'bf16[16,32]{1,0:T(8,128)(2,1)}', space=vmem, size = 0x1000, scoped, tag = 'scratch operand']
  %s0 = inlined_call_operand.hbm [shape: bf16[16,32], index: 0, kind: input, shape index: {}]
  %s1 = inlined_call_operand.hbm [shape: bf16[32,32], index: 1, kind: input, shape index: {}]
  %s2 = inlined_call_operand.vmem [shape: f32[1,32], index: 2, kind: input, shape index: {}]
  %s3 = inlined_call_operand.vmem [shape: f32[1,32], index: 3, kind: input, shape index: {}]
  %s4 = inlined_call_operand.vmem [shape: f32[1,32], index: 4, kind: input, shape index: {}]
  %s5 = inlined_call_operand.hbm [shape: bf16[32,128], index: 5, kind: input, shape index: {}]
  %s6 = inlined_call_operand.vmem [shape: f32[1,128], index: 6, kind: input, shape index: {}]
  %s7 = inlined_call_operand.hbm [shape: f32[16,128], index: 7, kind: output, shape index: {}]
  %s8 = sld [smem:[#allocation0]]
  $region54: #{tpu_custom_call.1} parent=0
    _
  %s10 = ssub.s32 1, %s8
  %s11 = scalar_select 0, %s10, %s8
  $region1: #{tpu_custom_call.1} parent=0
    #allocation3 [shape = 'u8[4096]{0}', space=vmem, size = 0x1000, scoped, tag = 'input window, operand 0, single buffered']
    #allocation4 [shape = 's32[1]{0}', space=sflag, size = 0x4, scoped, tag = 'scoped memory for tpu_custom_call.1']
    #allocation5 [shape = 's32[1]{0}', space=sflag, size = 0x4, scoped, tag = 'scoped memory for tpu_custom_call.1']
    #allocation6 [shape = 'u8[8192]{0}', space=vmem, size = 0x2000, scoped, tag = 'input window, operand 1, single buffered']
    #allocation7 [shape = 's32[1]{0}', space=sflag, size = 0x4, scoped, tag = 'scoped memory for tpu_custom_call.1']
    #allocation8 [shape = 'u8[8192]{0}', space=vmem, size = 0x2000, scoped, tag = 'input window, operand 5, single buffered']
    #allocation9 [shape = 'u8[8192]{0}', space=vmem, size = 0x2000, scoped, tag = 'output window, operand 0, single buffered']
    %12 = vsyncpa [#allocation4], 0
    %13 = vsyncpa [#allocation7], 0
    %14 = vsyncpa [#allocation5], 0
    // Predicated region
    $region2: #{tpu_custom_call.1} parent=1 // pred_check
      _
    $region3: #{tpu_custom_call.1} parent=1 // pred_check_branch
      %16 = sbr.rel (0) target = $region5
    $region4: #{tpu_custom_call.1} parent=1 // pred_region
      %18 = vsyncadd [#allocation4], 0
      %s19 = sshll.u32 %s0, 4
      %s20 = int_to_ptr.hbm [resolvable:$true] %s19
      %s21 = sshll.u32 [#allocation3], 4
      %s22 = int_to_ptr.vmem [resolvable:$true] %s21
      %27 = dma.hbm_to_vmem [thread:$0]  %s20, 128, %s22, [#allocation4], 64, 64, 4
    $region5: #{tpu_custom_call.1} parent=1 // pred_fallthru
      _
    // Predicated region
    $region6: #{tpu_custom_call.1} parent=1 // pred_check
      _
    $region7: #{tpu_custom_call.1} parent=1 // pred_check_branch
      %29 = sbr.rel (0) target = $region9
    $region8: #{tpu_custom_call.1} parent=1 // pred_region
      %31 = vsyncadd [#allocation7], 0
      %s32 = sshll.u32 %s1, 4
      %s33 = int_to_ptr.hbm [resolvable:$true] %s32
      %s34 = sshll.u32 [#allocation6], 4
      %s35 = int_to_ptr.vmem [resolvable:$true] %s34
      %40 = dma.hbm_to_vmem [thread:$0]  %s33, 256, %s35, [#allocation7], 64, 64, 4
    $region9: #{tpu_custom_call.1} parent=1 // pred_fallthru
      _
    // Predicated region
    $region10: #{tpu_custom_call.1} parent=1 // pred_check
      _
    $region11: #{tpu_custom_call.1} parent=1 // pred_check_branch
      %42 = sbr.rel (0) target = $region13
    $region12: #{tpu_custom_call.1} parent=1 // pred_region
      _
    $region13: #{tpu_custom_call.1} parent=1 // pred_fallthru
      _
    // Predicated region
    $region14: #{tpu_custom_call.1} parent=1 // pred_check
      _
    $region15: #{tpu_custom_call.1} parent=1 // pred_check_branch
      %44 = sbr.rel (0) target = $region17
    $region16: #{tpu_custom_call.1} parent=1 // pred_region
      _
    $region17: #{tpu_custom_call.1} parent=1 // pred_fallthru
      _
    // Predicated region
    $region18: #{tpu_custom_call.1} parent=1 // pred_check
      _
    $region19: #{tpu_custom_call.1} parent=1 // pred_check_branch
      %46 = sbr.rel (0) target = $region21
    $region20: #{tpu_custom_call.1} parent=1 // pred_region
      _
    $region21: #{tpu_custom_call.1} parent=1 // pred_fallthru
      _
    // Predicated region
    $region22: #{tpu_custom_call.1} parent=1 // pred_check
      _
    $region23: #{tpu_custom_call.1} parent=1 // pred_check_branch
      %48 = sbr.rel (0) target = $region25
    $region24: #{tpu_custom_call.1} parent=1 // pred_region
      %50 = vsyncadd [#allocation7], 0
      %s51 = sshll.u32 %s5, 4
      %s52 = int_to_ptr.hbm [resolvable:$true] %s51
      %s53 = sshll.u32 [#allocation8], 4
      %s54 = int_to_ptr.vmem [resolvable:$true] %s53
      %59 = dma.hbm_to_vmem [thread:$0]  %s52, 256, %s54, [#allocation7], 64, 64, 4
    $region25: #{tpu_custom_call.1} parent=1 // pred_fallthru
      _
    // Predicated region
    $region26: #{tpu_custom_call.1} parent=1 // pred_check
      _
    $region27: #{tpu_custom_call.1} parent=1 // pred_check_branch
      %61 = sbr.rel (0) target = $region29
    $region28: #{tpu_custom_call.1} parent=1 // pred_region
      _
    $region29: #{tpu_custom_call.1} parent=1 // pred_fallthru
      _
    // Predicated region
    $region30: #{tpu_custom_call.1} parent=1 // pred_check
      _
    $region31: #{tpu_custom_call.1} parent=1 // pred_check_branch
      %63 = sbr.rel (0) target = $region33
    $region32: #{tpu_custom_call.1} parent=1 // pred_region
      %65 = dma.done [#allocation4], 128
    $region33: #{tpu_custom_call.1} parent=1 // pred_fallthru
      _
    // Predicated region
    $region34: #{tpu_custom_call.1} parent=1 // pred_check
      _
    $region35: #{tpu_custom_call.1} parent=1 // pred_check_branch
      %67 = sbr.rel (0) target = $region37
    $region36: #{tpu_custom_call.1} parent=1 // pred_region
      %69 = dma.done [#allocation7], 256
    $region37: #{tpu_custom_call.1} parent=1 // pred_fallthru
      _
    // Predicated region
    $region38: #{tpu_custom_call.1} parent=1 // pred_check
      _
    $region39: #{tpu_custom_call.1} parent=1 // pred_check_branch
      %71 = sbr.rel (0) target = $region41
    $region40: #{tpu_custom_call.1} parent=1 // pred_region
      %73 = dma.done [#allocation7], 256
    $region41: #{tpu_custom_call.1} parent=1 // pred_fallthru
      _
    %p75 = scmp.eq.s32.totalorder 0, 0
    // Predicated region
    $region42: #{tpu_custom_call.1} parent=1 // pred_check
      %p76 = pneg %p75
    $region43: #{tpu_custom_call.1} parent=1 // pred_check_branch
      %78 = sbr.rel (%p76) target = $region45
    $region44: #{tpu_custom_call.1} parent=1 // pred_region
      %v79 = vld [vmem:[#allocation3] sm:$0xf]
      %v80 = vld [vmem:[#allocation3 + $0x4] sm:$0xf]
      %v81 = vld [vmem:[#allocation6] sm:$0xf]
      %v82 = vld [vmem:[#allocation6 + $0x4] sm:$0xf]
      %v83 = vld [vmem:[#allocation6 + $0x8] sm:$0xf]
      %v84 = vld [vmem:[#allocation6 + $0xc] sm:$0xf]
      %v85 = vld [vmem:[%s2] sm:$0x1]
      %v87 = vperm.slane %v85, 0
      %v91 = vunpack.c.l.b16 %v79
      %v92 = vunpack.c.l.b16 %v80
      %v93 = vpack.c.b16 %v92, %v91
      %v98 = vunpack.c.l.b16 %v81
      %v99 = vunpack.c.l.b16 %v82
      %v100 = vunpack.c.l.b16 %v83
      %v101 = vunpack.c.l.b16 %v84
      %v102 = vpack.c.b16 %v99, %v98
      %v103 = vpack.c.b16 %v101, %v100
      %vm106 = vcmask 261120
      %v108 = vsel %vm106, %v93, 0
      %110 = vmatpush.bf16.msra.mxu0 0
      %111 = vmatpush.bf16.msra.mxu0 0
      %112 = vmatpush.bf16.msra.mxu0 0
      %113 = vmatpush.bf16.msra.mxu0 0
      %114 = vmatpush.bf16.msra.mxu0 0
      %115 = vmatpush.bf16.msra.mxu0 0
      %116 = vmatpush.bf16.msra.mxu0 %v103
      %117 = vmatpush.bf16.msra.mxu0 %v102
      %118 = vmatmul.bf16.gmra.mxu0 %v108
      %v119 = vpop.f32.mrf.mxu0
      %v120 = vadd.f32 %v87, %v119
      %v121 = vpop.f32.mrf.mxu0
      %v122 = vadd.f32 %v87, %v121
      %123 = vdwg.mxu0
      %v124 = vsel %vm106, %v120, 0.0
      %125 = vadd.xlane.f32.xlu0 %v124
      %v126 = vpop.xlane.xlu0 %125
      %v127 = vsel %vm106, %v122, 0.0
      %128 = vadd.xlane.f32.xlu0 %v127
      %v129 = vpop.xlane.xlu0 %128
      %v130 = vmul.f32 %v126, 0.03125
      %v131 = vmul.f32 %v129, 0.03125
      %v132 = vmul.f32 %v120, %v120
      %v133 = vmul.f32 %v122, %v122
      %v134 = vsel %vm106, %v132, 0.0
      %135 = vadd.xlane.f32.xlu0 %v134
      %v136 = vpop.xlane.xlu0 %135
      %v137 = vsel %vm106, %v133, 0.0
      %138 = vadd.xlane.f32.xlu0 %v137
      %v139 = vpop.xlane.xlu0 %138
      %v140 = vmul.f32 %v136, 0.03125
      %v141 = vmul.f32 %v139, 0.03125
      %v142 = vmul.f32 %v130, %v130
      %v143 = vmul.f32 %v131, %v131
      %v144 = vsub.f32 %v140, %v142
      %v145 = vsub.f32 %v141, %v143
      %v146 = vmax.f32 %v144, 0.0
      %v147 = vmax.f32 %v145, 0.0
      %v148 = vsub.f32 %v120, %v130
      %v149 = vsub.f32 %v122, %v131
      %v150 = vadd.f32 %v146, 1e-05
      %v151 = vadd.f32 %v147, 1e-05
      %v152 = vrsqrt.pop %v150
      %v153 = vmul.f32 %v152, %v150
      %v154 = vmul.f32 %v153, %v152
      %v155 = vmul.f32 0.5, %v154
      %v156 = vsub.f32 1.5, %v155
      %v157 = vmul.f32 %v152, %v156
      %vm158 = vweird.f32 %v150
      %vm159 = vweird.f32 %v152
      %vm160 = vmor %vm158, %vm159
      %v161 = vsel %vm160, %v152, %v157
      %v162 = vrsqrt.pop %v151
      %v163 = vmul.f32 %v162, %v151
      %v164 = vmul.f32 %v163, %v162
      %v165 = vmul.f32 0.5, %v164
      %v166 = vsub.f32 1.5, %v165
      %v167 = vmul.f32 %v162, %v166
      %vm168 = vweird.f32 %v151
      %vm169 = vweird.f32 %v162
      %vm170 = vmor %vm168, %vm169
      %v171 = vsel %vm170, %v162, %v167
      %v172 = vmul.f32 %v148, %v161
      %v173 = vmul.f32 %v149, %v171
      %v174 = vld [vmem:[%s3] sm:$0x1]
      %v176 = vperm.slane %v174, 0
      %v178 = vmul.f32 %v172, %v176
      %v179 = vmul.f32 %v173, %v176
      %v180 = vld [vmem:[%s4] sm:$0x1]
      %v182 = vperm.slane %v180, 0
      %v184 = vadd.f32 %v178, %v182
      %v185 = vadd.f32 %v179, %v182
      %v186 = vmul.f32 %v184, 0.5
      %v187 = vmul.f32 %v185, 0.5
      %v188 = vmul.f32 %v184, 0.70710677
      %v189 = vmul.f32 %v185, 0.70710677
      %v190 = vmul.f32 %v188, %v188
      %v191 = vmin.f32 16.0, %v190
      %v192 = vmul.f32 %v191, 2.1237322e-06
      %v193 = vadd.f32 %v192, 0.00028619796
      %v194 = vmul.f32 %v191, %v193
      %v195 = vadd.f32 %v194, 0.0036580483
      %v196 = vmul.f32 %v191, %v195
      %v197 = vadd.f32 %v196, 0.05243302
      %v198 = vmul.f32 %v191, %v197
      %v199 = vadd.f32 %v198, 0.18741608
      %v200 = vmul.f32 %v191, %v199
      %v201 = vadd.f32 %v200, 1.1283791
      %v202 = vmul.f32 %v188, %v201
      %v203 = vmul.f32 %v191, 3.8918573e-05
      %v204 = vadd.f32 %v203, 0.001143296
      %v205 = vmul.f32 %v191, %v204
      %v206 = vadd.f32 %v205, 0.014752088
      %v207 = vmul.f32 %v191, %v206
      %v208 = vadd.f32 %v207, 0.112945676
      %v209 = vmul.f32 %v191, %v208
      %v210 = vadd.f32 %v209, 0.4994258
      %v211 = vmul.f32 %v191, %v210
      %v212 = vadd.f32 %v211, 1.0
      %v213 = vrcp.pop %v212
      %v214 = vmul.f32 %v212, %v213
      %v215 = vsub.f32 1.0, %v214
      %v216 = vmul.f32 %v213, %v215
      %v217 = vadd.f32 %v213, %v216
      %vm218 = vweird.f32 %v212
      %vm219 = vweird.f32 %v213
      %vm220 = vmor %vm218, %vm219
      %v221 = vsel %vm220, %v213, %v217
      %v222 = vand.u32 2147483647, %v212
      %vm223 = vcmp.eq.f32.partialorder %v222, 8.507059e+37
      %v224 = vand.u32 %v212, 2147483648
      %v225 = vor.u32 1.1754944e-38, %v224
      %v226 = vsel %vm223, %v225, %v221
      %v227 = vmul.f32 %v202, %v226
      %v228 = vmin.f32 %v227, 1.0
      %v229 = vmax.f32 %v228, -1.0
      %v230 = vmul.f32 %v189, %v189
      %v231 = vmin.f32 16.0, %v230
      %v232 = vmul.f32 %v231, 2.1237322e-06
      %v233 = vadd.f32 %v232, 0.00028619796
      %v234 = vmul.f32 %v231, %v233
      %v235 = vadd.f32 %v234, 0.0036580483
      %v236 = vmul.f32 %v231, %v235
      %v237 = vadd.f32 %v236, 0.05243302
      %v238 = vmul.f32 %v231, %v237
      %v239 = vadd.f32 %v238, 0.18741608
      %v240 = vmul.f32 %v231, %v239
      %v241 = vadd.f32 %v240, 1.1283791
      %v242 = vmul.f32 %v189, %v241
      %v243 = vmul.f32 %v231, 3.8918573e-05
      %v244 = vadd.f32 %v243, 0.001143296
      %v245 = vmul.f32 %v231, %v244
      %v246 = vadd.f32 %v245, 0.014752088
      %v247 = vmul.f32 %v231, %v246
      %v248 = vadd.f32 %v247, 0.112945676
      %v249 = vmul.f32 %v231, %v248
      %v250 = vadd.f32 %v249, 0.4994258
      %v251 = vmul.f32 %v231, %v250
      %v252 = vadd.f32 %v251, 1.0
      %v253 = vrcp.pop %v252
      %v254 = vmul.f32 %v252, %v253
      %v255 = vsub.f32 1.0, %v254
      %v256 = vmul.f32 %v253, %v255
      %v257 = vadd.f32 %v253, %v256
      %vm258 = vweird.f32 %v252
      %vm259 = vweird.f32 %v253
      %vm260 = vmor %vm258, %vm259
      %v261 = vsel %vm260, %v253, %v257
      %v262 = vand.u32 2147483647, %v252
      %vm263 = vcmp.eq.f32.partialorder %v262, 8.507059e+37
      %v264 = vand.u32 %v252, 2147483648
      %v265 = vor.u32 1.1754944e-38, %v264
      %v266 = vsel %vm263, %v265, %v261
      %v267 = vmul.f32 %v242, %v266
      %v268 = vmin.f32 %v267, 1.0
      %v269 = vmax.f32 %v268, -1.0
      %v270 = vadd.f32 %v229, 1.0
      %v271 = vadd.f32 %v269, 1.0
      %v272 = vmul.f32 %v186, %v270
      %v273 = vmul.f32 %v187, %v271
      %v274 = vpack.c.bf16 %v272, %v272
      %v275 = vpack.c.bf16 %v273, %v273
      %vm276 = vcmask 257024
      %277 = vst.msk [vmem:[#allocation2] sm:$0xf] %vm276, %v274
      %278 = vst.msk [vmem:[#allocation2 + $0x4] sm:$0xf] %vm276, %v275
    $region45: #{tpu_custom_call.1} parent=1 // pred_fallthru
      _
    %v279 = vld [vmem:[#allocation2] sm:$0xf]
    %v280 = vld [vmem:[#allocation2 + $0x4] sm:$0xf]
    %v281 = vld [vmem:[#allocation8] sm:$0xf]
    %v282 = vld [vmem:[#allocation8 + $0x4] sm:$0xf]
    %v283 = vld [vmem:[#allocation8 + $0x8] sm:$0xf]
    %v284 = vld [vmem:[#allocation8 + $0xc] sm:$0xf]
    %v285 = vld [vmem:[%s6] sm:$0x1]
    %v287 = vperm.slane %v285, 0
    %v291 = vunpack.c.l.b16 %v279
    %v292 = vunpack.c.l.b16 %v280
    %v293 = vpack.c.b16 %v292, %v291
    %v298 = vunpack.c.l.b16 %v281
    %v299 = vunpack.c.l.b16 %v282
    %v300 = vunpack.c.l.b16 %v283
    %v301 = vunpack.c.l.b16 %v284
    %v302 = vpack.c.b16 %v299, %v298
    %v303 = vpack.c.b16 %v301, %v300
    %vm306 = vcmask 261120
    %v308 = vsel %vm306, %v293, 0
    %310 = vmatpush.bf16.msra.mxu0 0
    %311 = vmatpush.bf16.msra.mxu0 0
    %312 = vmatpush.bf16.msra.mxu0 0
    %313 = vmatpush.bf16.msra.mxu0 0
    %314 = vmatpush.bf16.msra.mxu0 0
    %315 = vmatpush.bf16.msra.mxu0 0
    %316 = vmatpush.bf16.msra.mxu0 %v303
    %317 = vmatpush.bf16.msra.mxu0 %v302
    %318 = vmatmul.bf16.gmra.mxu0 %v308
    %v319 = vpop.f32.mrf.mxu0
    %v320 = vadd.f32 %v287, %v319
    %v321 = vpop.f32.mrf.mxu0
    %v322 = vadd.f32 %v287, %v321
    %323 = vdwg.mxu0
    %324 = vst [vmem:[#allocation9] sm:$0xff] %v320
    %325 = vst [vmem:[#allocation9 + $0x8] sm:$0xff] %v322
    // Predicated region
    $region46: #{tpu_custom_call.1} parent=1 // pred_check
      _
    $region47: #{tpu_custom_call.1} parent=1 // pred_check_branch
      %327 = sbr.rel (0) target = $region49
    $region48: #{tpu_custom_call.1} parent=1 // pred_region
      %329 = vsyncadd [#allocation5], 0
      %s330 = sshll.u32 [#allocation9], 4
      %s331 = int_to_ptr.vmem [resolvable:$true] %s330
      %s332 = sshll.u32 %s7, 4
      %s333 = int_to_ptr.hbm [resolvable:$true] %s332
      %338 = dma.vmem_to_hbm [thread:$0]  %s331, 256, %s333, [#allocation5], 128, 128, 8
    $region49: #{tpu_custom_call.1} parent=1 // pred_fallthru
      _
    // Predicated region
    $region50: #{tpu_custom_call.1} parent=1 // pred_check
      _
    $region51: #{tpu_custom_call.1} parent=1 // pred_check_branch
      %340 = sbr.rel (0) target = $region53
    $region52: #{tpu_custom_call.1} parent=1 // pred_region
      %342 = dma.done [#allocation5], 256
    $region53: #{tpu_custom_call.1} parent=1 // pred_fallthru
      _
    %343 = vsyncpa [#allocation4], 1
    %344 = vsyncpa [#allocation7], 1
    %345 = vsyncpa [#allocation5], 1

</llo_original>
